<compile_context>
chip_gen: v7x
topology: tpu7x:2x2x1
jax: 0.10.0
libtpu: 0.0.40
codegen_flags: <defaults>
</compile_context>

<pallas_src>
import functools

import jax
import jax.numpy as jnp
from jax import lax
from jax.experimental import pallas as pl
from jax.experimental.pallas import tpu as pltpu


# ---------------------------------------------------------------------------
# Kernel A: fused (depthwise x pointwise) matmul + resident per-image BN partial stats
# ---------------------------------------------------------------------------
def _conv_stats_kernel(taps_ref, w_ref, out_ref, psum_ref, psumsq_ref):
    # taps_ref: (1, 9*Cin, TP) [bf16]   w_ref: (Cout_p, 9*Cin) [f32]
    # out_ref : (1, Cout_p, TP)         psum_ref / psumsq_ref: (1, Cout_p, 1) [f32, resident]
    t = pl.program_id(1)

    @pl.when(t == 0)
    def _():
        psum_ref[...] = jnp.zeros_like(psum_ref)
        psumsq_ref[...] = jnp.zeros_like(psumsq_ref)

    taps = taps_ref[0].astype(jnp.float32)                               # upcast is VPU filler
    out = jnp.dot(w_ref[...], taps, preferred_element_type=jnp.float32)  # MXU, (Cout_p, TP) f32
    out_ref[0] = out.astype(out_ref.dtype)
    # Partial statistics from the f32 tile (before any downcast), accumulated in the resident
    # output block across the t ("arbitrary") axis; written back to HBM once per n.
    psum_ref[0] += jnp.sum(out, axis=1, keepdims=True)                   # (Cout_p, 1)
    psumsq_ref[0] += jnp.sum(out * out, axis=1, keepdims=True)           # (Cout_p, 1)


# ---------------------------------------------------------------------------
# Kernel B: BatchNorm affine + ReLU (lane-dense (Cout_p, TP) tiles, in-place over conv_out)
# ---------------------------------------------------------------------------
def _bn_relu_kernel(y_ref, scale_ref, bias_ref, o_ref):
    # y_ref: (1, Cout_p, TP)   scale_ref / bias_ref: (Cout_p, 1) [f32]
    y = y_ref[0].astype(jnp.float32)
    o_ref[0] = jnp.maximum(y * scale_ref[...] + bias_ref[...], 0.0).astype(o_ref.dtype)


# ---------------------------------------------------------------------------
# Generation-aware tiling helpers
# ---------------------------------------------------------------------------
def _vmem_limit_bytes():
    """Scoped VMEM limit derived from the chip (v5e/v6e: ~96 MiB, v7x: ~48 MiB)."""
    try:
        cap = pltpu.get_tpu_info().vmem_capacity_bytes
    except Exception:
        cap = 64 * 1024 * 1024  # conservative (v7x-sized) fallback
    return int(min(int(cap * 0.75), 100 * 1024 * 1024))


def _choose_tp(p_pad, k, cout_p, taps_bytes, act_bytes, vmem_limit):
    """Largest multiple-of-128 divisor of p_pad whose double-buffered working set fits."""
    per_col = 2 * (k * taps_bytes + cout_p * act_bytes)      # 2x taps block + 2x out block
    fixed = cout_p * k * 4 + 8 * cout_p * 4 + (64 << 10)     # w_eff + stats blocks + slack
    budget = max(int(vmem_limit * 0.85) - fixed, per_col * 128)
    tp_max = max(128, (budget // per_col) // 128 * 128)
    tp_max = min(tp_max, 8192, p_pad)
    best = 128
    t = 128
    while t <= tp_max:
        if p_pad % t == 0:
            best = t
        t += 128
    return best


# ---------------------------------------------------------------------------
# Wrapper
# ---------------------------------------------------------------------------
@jax.jit
def conv_down_forward(x_nchw, dw_weight, pw_weight, gamma, beta, eps=1e-5):
    """ConvDown forward. x_nchw: (N, Cin, H, W) -> (N, Cout, Ho, Wo), NCHW in and out."""
    N, Cin, H, W = x_nchw.shape
    Cout = pw_weight.shape[0]
    Ho = (H - 1) // 2 + 1          # kernel 3, stride 2, pad 1
    Wo = (W - 1) // 2 + 1
    P = Ho * Wo
    K = 9 * Cin

    taps_dtype = jnp.bfloat16
    # bf16 outputs only pay off when Cout fills a packed sublane group; otherwise stay f32.
    act_dtype = jnp.bfloat16 if Cout >= 16 else jnp.float32
    sub = 16 if act_dtype == jnp.bfloat16 else 8
    Cout_p = ((Cout + sub - 1) // sub) * sub
    P_pad = ((P + 127) // 128) * 128                     # lane-dense, VMEM-bounded tiles always

    # ---- XLA glue: pad + gather the 9 stride-2 taps into the lane-dense matmul-ready layout,
    # streamed in bf16 (halves the dominant HBM write+read).
    x_q = x_nchw.astype(taps_dtype)
    xp = jnp.pad(x_q, ((0, 0), (0, 0), (1, 1), (1, 1)))
    taps = jnp.stack(
        [xp[:, :, kh:kh + 2 * Ho:2, kw:kw + 2 * Wo:2] for kh in range(3) for kw in range(3)],
        axis=1,                                          # (N, 9, Cin, Ho, Wo)
    ).reshape(N, K, P)                                   # (N, 9*Cin, P)
    if P_pad != P:
        taps = jnp.pad(taps, ((0, 0), (0, 0), (0, P_pad - P)))   # zero taps -> zero conv output

    # Fold depthwise into pointwise: w_eff[co, k*Cin + c] = pw[co, c] * dw[c, k] (kept in f32).
    dw = dw_weight[:, 0].reshape(Cin, 9).astype(jnp.float32)            # (Cin, 9), k = kh*3+kw
    pw = pw_weight[:, :, 0, 0].astype(jnp.float32)                      # (Cout, Cin)
    if Cout_p != Cout:
        pw = jnp.pad(pw, ((0, Cout_p - Cout), (0, 0)))
    w_eff = (pw[:, None, :] * dw.T[None, :, :]).reshape(Cout_p, K)      # (Cout_p, 9*Cin)

    gamma_p = gamma.astype(jnp.float32)
    beta_p = beta.astype(jnp.float32)
    if Cout_p != Cout:
        gamma_p = jnp.pad(gamma_p, (0, Cout_p - Cout), constant_values=1.0)
        beta_p = jnp.pad(beta_p, (0, Cout_p - Cout))

    vmem_limit = _vmem_limit_bytes()
    TP = _choose_tp(P_pad, K, Cout_p,
                    taps_bytes=jnp.dtype(taps_dtype).itemsize,
                    act_bytes=jnp.dtype(act_dtype).itemsize,
                    vmem_limit=vmem_limit)
    nT = P_pad // TP
    grid = (N, nT)

    cparams_a = pltpu.CompilerParams(
        dimension_semantics=("parallel", "arbitrary"),   # n shardable across cores; t accumulates
        vmem_limit_bytes=vmem_limit,
    )
    cparams_b = pltpu.CompilerParams(
        dimension_semantics=("parallel", "parallel"),
        vmem_limit_bytes=vmem_limit,
    )

    # ---- Kernel A: one MXU matmul per tile + resident per-image BN partial stats ----
    conv_out, psum, psumsq = pl.pallas_call(
        _conv_stats_kernel,
        out_shape=(
            jax.ShapeDtypeStruct((N, Cout_p, P_pad), act_dtype),
            jax.ShapeDtypeStruct((N, Cout_p, 1), jnp.float32),
            jax.ShapeDtypeStruct((N, Cout_p, 1), jnp.float32),
        ),
        grid_spec=pltpu.PrefetchScalarGridSpec(
            num_scalar_prefetch=0,
            grid=grid,
            in_specs=[
                pl.BlockSpec((1, K, TP), lambda n, t: (n, 0, t)),
                pl.BlockSpec((Cout_p, K), lambda n, t: (0, 0)),
            ],
            out_specs=[
                pl.BlockSpec((1, Cout_p, TP), lambda n, t: (n, 0, t)),
                pl.BlockSpec((1, Cout_p, 1), lambda n, t: (n, 0, 0)),   # resident across t
                pl.BlockSpec((1, Cout_p, 1), lambda n, t: (n, 0, 0)),   # resident across t
            ],
        ),
        compiler_params=cparams_a,
    )(taps, w_eff)

    # ---- glue: fold partial stats into the per-channel BN affine (training semantics) ----
    # NOTE: E[x^2]-E[x]^2 in f32 can cancel for large activations; fine at demo tolerances.
    # The P_pad/Cout_p zero padding contributes 0 to both sums, so dividing by the true count
    # keeps the statistics exact.
    count = jnp.float32(N * P)
    mean = jnp.sum(psum, axis=0) / count                                # (Cout_p, 1)
    var = jnp.sum(psumsq, axis=0) / count - mean * mean                 # biased variance
    scale = gamma_p.reshape(Cout_p, 1) * lax.rsqrt(var + eps)
    bias = beta_p.reshape(Cout_p, 1) - mean * scale

    # ---- Kernel B: BN affine + ReLU, in place over conv_out ----
    y = pl.pallas_call(
        _bn_relu_kernel,
        out_shape=jax.ShapeDtypeStruct((N, Cout_p, P_pad), act_dtype),
        grid_spec=pltpu.PrefetchScalarGridSpec(
            num_scalar_prefetch=0,
            grid=grid,
            in_specs=[
                pl.BlockSpec((1, Cout_p, TP), lambda n, t: (n, 0, t)),
                pl.BlockSpec((Cout_p, 1), lambda n, t: (0, 0)),
                pl.BlockSpec((Cout_p, 1), lambda n, t: (0, 0)),
            ],
            out_specs=pl.BlockSpec((1, Cout_p, TP), lambda n, t: (n, 0, t)),
        ),
        input_output_aliases={0: 0},     # overwrite conv_out in place (footprint win)
        compiler_params=cparams_b,
    )(conv_out, scale, bias)

    # Strip padding (no-op when Cout_p==Cout and P_pad==P); contiguous reshape, no transpose.
    return y[:, :Cout, :P].reshape(N, Cout, Ho, Wo)


# ---------------------------------------------------------------------------
# Pure-JAX reference reproducing the PyTorch forward (NCHW)
# ---------------------------------------------------------------------------
def _reference(x_nchw, dw_weight, pw_weight, gamma, beta, eps=1e-5):
    Cin = x_nchw.shape[1]
    dn = lax.conv_dimension_numbers(x_nchw.shape, dw_weight.shape, ("NCHW", "OIHW", "NCHW"))
    dw_out = lax.conv_general_dilated(
        x_nchw, dw_weight, window_strides=(2, 2), padding=((1, 1), (1, 1)),
        dimension_numbers=dn, feature_group_count=Cin)
    dn2 = lax.conv_dimension_numbers(dw_out.shape, pw_weight.shape, ("NCHW", "OIHW", "NCHW"))
    pw_out = lax.conv_general_dilated(
        dw_out, pw_weight, window_strides=(1, 1), padding=((0, 0), (0, 0)),
        dimension_numbers=dn2)
    mean = jnp.mean(pw_out, axis=(0, 2, 3), keepdims=True)
    var = jnp.var(pw_out, axis=(0, 2, 3), keepdims=True)  # biased
    y = (pw_out - mean) / jnp.sqrt(var + eps) * gamma.reshape(1, -1, 1, 1) + beta.reshape(1, -1, 1, 1)
    return jnp.maximum(y, 0.0)


if __name__ == "__main__":
    N, Cin, Cout, H, W = 2, 4, 8, 16, 16

    key = jax.random.PRNGKey(0)
    kx, kdw, kpw, kg, kb = jax.random.split(key, 5)

    x = jax.random.normal(kx, (N, Cin, H, W), dtype=jnp.float32)
    # SeparableConv2d params: depthwise (Cin, 1, 3, 3), pointwise (Cout, Cin, 1, 1), bias=False
    dw_weight = 0.1 * jax.random.normal(kdw, (Cin, 1, 3, 3), dtype=jnp.float32)
    pw_weight = 0.1 * jax.random.normal(kpw, (Cout, Cin, 1, 1), dtype=jnp.float32)
    # BatchNorm2d params (gamma, beta); batch statistics computed in-kernel (training mode)
    gamma = 1.0 + 0.1 * jax.random.normal(kg, (Cout,), dtype=jnp.float32)
    beta = 0.1 * jax.random.normal(kb, (Cout,), dtype=jnp.float32)

    out = jax.block_until_ready(conv_down_forward(x, dw_weight, pw_weight, gamma, beta))

    # The kernel streams the input taps in bf16 (per perf review); compare against an f32
    # reference fed the identically-quantized input so only the kernel logic is under test.
    x_q = x.astype(jnp.bfloat16).astype(jnp.float32)
    ref = jax.block_until_ready(_reference(x_q, dw_weight, pw_weight, gamma, beta))

    assert out.shape == (N, Cout, H // 2, W // 2), out.shape
    err = float(jnp.max(jnp.abs(out.astype(jnp.float32) - ref)))
    assert jnp.allclose(out.astype(jnp.float32), ref, rtol=1e-3, atol=1e-3), err
    print("KERNEL_OK")
</pallas_src>

<mosaic_0001>
module attributes {stable_mosaic.version = 11 : i64} {
  func.func @_conv_stats_kernel(%arg0: i32, %arg1: i32, %arg2: memref<1x36x128xbf16, #tpu.memory_space<vmem>>, %arg3: memref<8x36xf32, #tpu.memory_space<vmem>>, %arg4: memref<1x8x128xf32, #tpu.memory_space<vmem>>, %arg5: memref<1x8x1xf32, #tpu.memory_space<vmem>>, %arg6: memref<1x8x1xf32, #tpu.memory_space<vmem>>) attributes {dimension_semantics = [#tpu.dimension_semantics<parallel>, #tpu.dimension_semantics<arbitrary>], iteration_bounds = array<i64: 2, 1>, scalar_prefetch = 0 : i64, scratch_operands = 0 : i64, tpu.core_type = #tpu.core_type<tc>, window_params = [{transform_indices = @transform_0, window_bounds = array<i64: 1, 36, 128>}, {pipeline_mode = #tpu.pipeline_mode<synchronous>, transform_indices = @transform_1, window_bounds = array<i64: 8, 36>}, {transform_indices = @transform_2, window_bounds = array<i64: 1, 8, 128>}, {transform_indices = @transform_3, window_bounds = array<i64: 1, 8, 1>}, {transform_indices = @transform_4, window_bounds = array<i64: 1, 8, 1>}]} {
    %c0_i32 = arith.constant 0 : i32
    %0 = arith.cmpi eq, %arg1, %c0_i32 : i32
    %1 = arith.extui %0 : i1 to i32
    %c0_i32_0 = arith.constant 0 : i32
    %2 = arith.cmpi ne, %1, %c0_i32_0 : i32
    scf.if %2 {
      %cst_22 = arith.constant 0.000000e+00 : f32
      %28 = vector.broadcast %cst_22 : f32 to vector<1x8x1xf32>
      %c0_23 = arith.constant 0 : index
      %c0_24 = arith.constant 0 : index
      %c0_25 = arith.constant 0 : index
      %29 = vector.load %arg5[%c0_23, %c0_24, %c0_25] : memref<1x8x1xf32, #tpu.memory_space<vmem>>, vector<1x8x1xf32>
      tpu.vector_store %arg5[%c0_23, %c0_24, %c0_25], %28 {strides = array<i32>} : memref<1x8x1xf32, #tpu.memory_space<vmem>>, vector<1x8x1xf32>,
      %cst_26 = arith.constant 0.000000e+00 : f32
      %30 = vector.broadcast %cst_26 : f32 to vector<1x8x1xf32>
      %c0_27 = arith.constant 0 : index
      %c0_28 = arith.constant 0 : index
      %c0_29 = arith.constant 0 : index
      %31 = vector.load %arg6[%c0_27, %c0_28, %c0_29] : memref<1x8x1xf32, #tpu.memory_space<vmem>>, vector<1x8x1xf32>
      tpu.vector_store %arg6[%c0_27, %c0_28, %c0_29], %30 {strides = array<i32>} : memref<1x8x1xf32, #tpu.memory_space<vmem>>, vector<1x8x1xf32>,
    } else {
    }
    %c0 = arith.constant 0 : index
    %c0_1 = arith.constant 0 : index
    %c0_2 = arith.constant 0 : index
    %3 = vector.load %arg2[%c0, %c0_1, %c0_2] : memref<1x36x128xbf16, #tpu.memory_space<vmem>>, vector<1x36x128xbf16>
    %4 = vector.shape_cast %3 : vector<1x36x128xbf16> to vector<36x128xbf16>
    %5 = arith.extf %4 : vector<36x128xbf16> to vector<36x128xf32>
    %c0_3 = arith.constant 0 : index
    %c0_4 = arith.constant 0 : index
    %6 = vector.load %arg3[%c0_3, %c0_4] : memref<8x36xf32, #tpu.memory_space<vmem>>, vector<8x36xf32>
    %cst = arith.constant dense<0.000000e+00> : vector<8x128xf32>
    %7 = tpu.matmul %6, %5, %cst {dimension_numbers = #tpu.dot_dimension_numbers<[1], [0], [0], [1], [0, 0, 1, 1], [], []>} : vector<8x36xf32>, vector<36x128xf32>, vector<8x128xf32> -> vector<8x128xf32>
    %c0_5 = arith.constant 0 : index
    %c0_6 = arith.constant 0 : index
    %c0_7 = arith.constant 0 : index
    %8 = vector.load %arg4[%c0_5, %c0_6, %c0_7] : memref<1x8x128xf32, #tpu.memory_space<vmem>>, vector<1x8x128xf32>
    %9 = vector.shape_cast %8 : vector<1x8x128xf32> to vector<8x128xf32>
    %10 = vector.shape_cast %7 : vector<8x128xf32> to vector<1x8x128xf32>
    tpu.vector_store %arg4[%c0_5, %c0_6, %c0_7], %10 {strides = array<i32>} : memref<1x8x128xf32, #tpu.memory_space<vmem>>, vector<1x8x128xf32>,
    %c0_8 = arith.constant 0 : index
    %c0_9 = arith.constant 0 : index
    %c0_10 = arith.constant 0 : index
    %11 = vector.load %arg5[%c0_8, %c0_9, %c0_10] : memref<1x8x1xf32, #tpu.memory_space<vmem>>, vector<1x8x1xf32>
    %12 = vector.shape_cast %11 : vector<1x8x1xf32> to vector<8x1xf32>
    %cst_11 = arith.constant dense<0.000000e+00> : vector<8xf32>
    %13 = vector.multi_reduction <add>, %7, %cst_11 [1] : vector<8x128xf32> to vector<8xf32>
    %14 = vector.shape_cast %13 : vector<8xf32> to vector<8x1xf32>
    %15 = arith.addf %12, %14 : vector<8x1xf32>
    %c0_12 = arith.constant 0 : index
    %c0_13 = arith.constant 0 : index
    %c0_14 = arith.constant 0 : index
    %16 = vector.load %arg5[%c0_12, %c0_13, %c0_14] : memref<1x8x1xf32, #tpu.memory_space<vmem>>, vector<1x8x1xf32>
    %17 = vector.shape_cast %16 : vector<1x8x1xf32> to vector<8x1xf32>
    %18 = vector.shape_cast %15 : vector<8x1xf32> to vector<1x8x1xf32>
    tpu.vector_store %arg5[%c0_12, %c0_13, %c0_14], %18 {strides = array<i32>} : memref<1x8x1xf32, #tpu.memory_space<vmem>>, vector<1x8x1xf32>,
    %c0_15 = arith.constant 0 : index
    %c0_16 = arith.constant 0 : index
    %c0_17 = arith.constant 0 : index
    %19 = vector.load %arg6[%c0_15, %c0_16, %c0_17] : memref<1x8x1xf32, #tpu.memory_space<vmem>>, vector<1x8x1xf32>
    %20 = vector.shape_cast %19 : vector<1x8x1xf32> to vector<8x1xf32>
    %21 = arith.mulf %7, %7 : vector<8x128xf32>
    %cst_18 = arith.constant dense<0.000000e+00> : vector<8xf32>
    %22 = vector.multi_reduction <add>, %21, %cst_18 [1] : vector<8x128xf32> to vector<8xf32>
    %23 = vector.shape_cast %22 : vector<8xf32> to vector<8x1xf32>
    %24 = arith.addf %20, %23 : vector<8x1xf32>
    %c0_19 = arith.constant 0 : index
    %c0_20 = arith.constant 0 : index
    %c0_21 = arith.constant 0 : index
    %25 = vector.load %arg6[%c0_19, %c0_20, %c0_21] : memref<1x8x1xf32, #tpu.memory_space<vmem>>, vector<1x8x1xf32>
    %26 = vector.shape_cast %25 : vector<1x8x1xf32> to vector<8x1xf32>
    %27 = vector.shape_cast %24 : vector<8x1xf32> to vector<1x8x1xf32>
    tpu.vector_store %arg6[%c0_19, %c0_20, %c0_21], %27 {strides = array<i32>} : memref<1x8x1xf32, #tpu.memory_space<vmem>>, vector<1x8x1xf32>,
    return
  }
  func.func @transform_0(%arg0: i32, %arg1: i32) -> (i32, i32, i32) {
    %c0_i32 = arith.constant 0 : i32
    %c0_i32_0 = arith.constant 0 : i32
    return %arg0, %c0_i32, %arg1 : i32, i32, i32
  }
  func.func @transform_1(%arg0: i32, %arg1: i32) -> (i32, i32) {
    %c0_i32 = arith.constant 0 : i32
    %c0_i32_0 = arith.constant 0 : i32
    %c0_i32_1 = arith.constant 0 : i32
    return %c0_i32, %c0_i32_0 : i32, i32
  }
  func.func @transform_2(%arg0: i32, %arg1: i32) -> (i32, i32, i32) {
    %c0_i32 = arith.constant 0 : i32
    %c0_i32_0 = arith.constant 0 : i32
    return %arg0, %c0_i32, %arg1 : i32, i32, i32
  }
  func.func @transform_3(%arg0: i32, %arg1: i32) -> (i32, i32, i32) {
    %c0_i32 = arith.constant 0 : i32
    %c0_i32_0 = arith.constant 0 : i32
    %c0_i32_1 = arith.constant 0 : i32
    return %arg0, %c0_i32, %c0_i32_0 : i32, i32, i32
  }
  func.func @transform_4(%arg0: i32, %arg1: i32) -> (i32, i32, i32) {
    %c0_i32 = arith.constant 0 : i32
    %c0_i32_0 = arith.constant 0 : i32
    %c0_i32_1 = arith.constant 0 : i32
    return %arg0, %c0_i32, %c0_i32_0 : i32, i32, i32
  }
}

module attributes {stable_mosaic.version = 11 : i64} {
  func.func @_bn_relu_kernel(%arg0: i32, %arg1: i32, %arg2: memref<1x8x128xf32, #tpu.memory_space<vmem>>, %arg3: memref<8x1xf32, #tpu.memory_space<vmem>>, %arg4: memref<8x1xf32, #tpu.memory_space<vmem>>, %arg5: memref<1x8x128xf32, #tpu.memory_space<vmem>>) attributes {dimension_semantics = [#tpu.dimension_semantics<parallel>, #tpu.dimension_semantics<parallel>], iteration_bounds = array<i64: 2, 1>, scalar_prefetch = 0 : i64, scratch_operands = 0 : i64, tpu.core_type = #tpu.core_type<tc>, window_params = [{transform_indices = @transform_0, window_bounds = array<i64: 1, 8, 128>}, {pipeline_mode = #tpu.pipeline_mode<synchronous>, transform_indices = @transform_1, window_bounds = array<i64: 8, 1>}, {pipeline_mode = #tpu.pipeline_mode<synchronous>, transform_indices = @transform_2, window_bounds = array<i64: 8, 1>}, {transform_indices = @transform_3, window_bounds = array<i64: 1, 8, 128>}]} {
    %c0 = arith.constant 0 : index
    %c0_0 = arith.constant 0 : index
    %c0_1 = arith.constant 0 : index
    %0 = vector.load %arg2[%c0, %c0_0, %c0_1] : memref<1x8x128xf32, #tpu.memory_space<vmem>>, vector<1x8x128xf32>
    %1 = vector.shape_cast %0 : vector<1x8x128xf32> to vector<8x128xf32>
    %c0_2 = arith.constant 0 : index
    %c0_3 = arith.constant 0 : index
    %2 = vector.load %arg3[%c0_2, %c0_3] : memref<8x1xf32, #tpu.memory_space<vmem>>, vector<8x1xf32>
    %3 = vector.broadcast %2 : vector<8x1xf32> to vector<8x128xf32>
    %4 = arith.mulf %1, %3 : vector<8x128xf32>
    %c0_4 = arith.constant 0 : index
    %c0_5 = arith.constant 0 : index
    %5 = vector.load %arg4[%c0_4, %c0_5] : memref<8x1xf32, #tpu.memory_space<vmem>>, vector<8x1xf32>
    %6 = vector.broadcast %5 : vector<8x1xf32> to vector<8x128xf32>
    %7 = arith.addf %4, %6 : vector<8x128xf32>
    %cst = arith.constant 0.000000e+00 : f32
    %8 = vector.broadcast %cst : f32 to vector<8x128xf32>
    %9 = arith.maximumf %7, %8 : vector<8x128xf32>
    %c0_6 = arith.constant 0 : index
    %c0_7 = arith.constant 0 : index
    %c0_8 = arith.constant 0 : index
    %10 = vector.load %arg5[%c0_6, %c0_7, %c0_8] : memref<1x8x128xf32, #tpu.memory_space<vmem>>, vector<1x8x128xf32>
    %11 = vector.shape_cast %10 : vector<1x8x128xf32> to vector<8x128xf32>
    %12 = vector.shape_cast %9 : vector<8x128xf32> to vector<1x8x128xf32>
    tpu.vector_store %arg5[%c0_6, %c0_7, %c0_8], %12 {strides = array<i32>} : memref<1x8x128xf32, #tpu.memory_space<vmem>>, vector<1x8x128xf32>,
    return
  }
  func.func @transform_0(%arg0: i32, %arg1: i32) -> (i32, i32, i32) {
    %c0_i32 = arith.constant 0 : i32
    %c0_i32_0 = arith.constant 0 : i32
    return %arg0, %c0_i32, %arg1 : i32, i32, i32
  }
  func.func @transform_1(%arg0: i32, %arg1: i32) -> (i32, i32) {
    %c0_i32 = arith.constant 0 : i32
    %c0_i32_0 = arith.constant 0 : i32
    %c0_i32_1 = arith.constant 0 : i32
    return %c0_i32, %c0_i32_0 : i32, i32
  }
  func.func @transform_2(%arg0: i32, %arg1: i32) -> (i32, i32) {
    %c0_i32 = arith.constant 0 : i32
    %c0_i32_0 = arith.constant 0 : i32
    %c0_i32_1 = arith.constant 0 : i32
    return %c0_i32, %c0_i32_0 : i32, i32
  }
  func.func @transform_3(%arg0: i32, %arg1: i32) -> (i32, i32, i32) {
    %c0_i32 = arith.constant 0 : i32
    %c0_i32_0 = arith.constant 0 : i32
    return %arg0, %c0_i32, %arg1 : i32, i32, i32
  }
}

</mosaic_0001>

<llo_original>
// kernel: conv_down_forward.3
$region0: #{conv_down_forward.3}
  #allocation0 [shape = 'u32[]', space=smem, size = 0x4, offset = 0x4, fixed_abs, tag = 'smem constant byte address 0x4 - core index']
  #allocation1 [shape = 'u32[144,128]{1,0:T(1,128)}', space=vmem, size = 0x12000, scoped, tag = 'internal scratch']
  %s0 = inlined_call_operand.vmem [shape: f32[2,8,128], index: 0, kind: input, shape index: {}, may-alias: {0,3}]
  %s1 = inlined_call_operand.vmem [shape: f32[8,1], index: 1, kind: input, shape index: {}]
  %s2 = inlined_call_operand.vmem [shape: f32[8,1], index: 2, kind: input, shape index: {}]
  %s3 = inlined_call_operand.vmem [shape: f32[2,8,128], index: 3, kind: output, shape index: {}, may-alias: {0,3}]
  %s4 = sld [smem:[#allocation0]]
  $region45: #{conv_down_forward.3} parent=0
    _
  %s6 = ssub.s32 1, %s4
  %s7 = scalar_select 0, %s6, %s4
  loop: start=0, step=1, limit=4
  $region2: #{conv_down_forward.3} parent=0 // loop_pre_header
    _
  $region3: #{conv_down_forward.3} parent=0 // loop_header
    %s9 = sphi 0, %s13
    %p10 = scmp.ge.s32.totalorder %s9, 4
    %s16 = sphi 0, %s28
    %s17 = sphi 0, %s24
    %s18 = sphi 0, %s16
    %s19 = sphi 0, %s17
    %s20 = sphi 0, %s18
    %s21 = sphi 0, %s19
    %s33 = sphi 0, %s35
    %s36 = sphi 0, %s33
    %s37 = sphi 0, %s36
    %s53 = sphi 0, %s37
    %s57 = sphi 0, %s57
    %s59 = sphi 0, %s57
    %s60 = sphi 0, %s59
    %s74 = sphi 0, %s60
    %s78 = sphi 0, %s78
    %s80 = sphi 0, %s78
    %s81 = sphi 0, %s80
    %s95 = sphi 0, %s81
    %s103 = sphi 0, %s105
    %s106 = sphi 0, %s103
    %s107 = sphi 0, %s106
    %s123 = sphi 0, %s107
  $region4: #{conv_down_forward.3} parent=0 // loop_header_branch
    %12 = sbr.rel (%p10) target = $region8
  $region5: #{conv_down_forward.3} parent=0 // loop_body
    %s14 = ssub.s32 %s9, 1
    %s15 = ssub.s32 %s9, 2
    %s22 = sadd.s32 1, %s17
    %p23 = scmp.ge.s32.totalorder %s22, 1
    %s24 = scalar_select %p23, 0, %s22
    %s25 = sadd.s32 1, %s16
    %s26 = scalar_select %p23, %s25, %s16
    %p27 = scmp.ge.s32.totalorder %s26, 2
    %s28 = scalar_select %p27, 0, %s26
    %s29 = ssub.s32 %s16, %s28
    %s30 = ssub.s32 %s17, %s24
    %s31 = sor.u32 %s29, %s30
    %p32 = scmp.eq.s32.totalorder %s31, 0
    %s34 = sadd.s32 %s33, 1
    %s35 = scalar_select %p32, %s33, %s34
    %p38 = pneg %p32
    %p39 = scmp.eq.s32.totalorder %s9, 1
    %p40 = por %p38, %p39
    %p41 = scmp.ne.s32.totalorder %s33, %s36
    %p42 = scmp.eq.s32.totalorder %s9, 0
    %p43 = por %p41, %p42
    %p44 = scmp.ne.s32.totalorder %s33, %s36
    %p45 = scmp.eq.s32.totalorder %s14, 1
    %p46 = por %p44, %p45
    %p47 = scmp.ne.s32.totalorder %s36, %s37
    %p48 = scmp.eq.s32.totalorder %s14, 0
    %p49 = por %p47, %p48
    %p50 = scmp.ne.s32.totalorder %s36, %s37
    %p51 = scmp.eq.s32.totalorder %s15, 1
    %p52 = por %p50, %p51
    %p54 = scmp.ne.s32.totalorder %s37, %s53
    %p55 = scmp.eq.s32.totalorder %s15, 0
    %p56 = por %p54, %p55
    %s58 = sadd.s32 %s57, 1
    %p61 = scmp.eq.s32.totalorder %s9, 1
    %p62 = scmp.ne.s32.totalorder %s57, %s59
    %p63 = scmp.eq.s32.totalorder %s9, 0
    %p64 = por %p62, %p63
    %p65 = scmp.ne.s32.totalorder %s57, %s59
    %p66 = scmp.eq.s32.totalorder %s14, 1
    %p67 = por %p65, %p66
    %p68 = scmp.ne.s32.totalorder %s59, %s60
    %p69 = scmp.eq.s32.totalorder %s14, 0
    %p70 = por %p68, %p69
    %p71 = scmp.ne.s32.totalorder %s59, %s60
    %p72 = scmp.eq.s32.totalorder %s15, 1
    %p73 = por %p71, %p72
    %p75 = scmp.ne.s32.totalorder %s60, %s74
    %p76 = scmp.eq.s32.totalorder %s15, 0
    %p77 = por %p75, %p76
    %s79 = sadd.s32 %s78, 1
    %p82 = scmp.eq.s32.totalorder %s9, 1
    %p83 = scmp.ne.s32.totalorder %s78, %s80
    %p84 = scmp.eq.s32.totalorder %s9, 0
    %p85 = por %p83, %p84
    %p86 = scmp.ne.s32.totalorder %s78, %s80
    %p87 = scmp.eq.s32.totalorder %s14, 1
    %p88 = por %p86, %p87
    %p89 = scmp.ne.s32.totalorder %s80, %s81
    %p90 = scmp.eq.s32.totalorder %s14, 0
    %p91 = por %p89, %p90
    %p92 = scmp.ne.s32.totalorder %s80, %s81
    %p93 = scmp.eq.s32.totalorder %s15, 1
    %p94 = por %p92, %p93
    %p96 = scmp.ne.s32.totalorder %s81, %s95
    %p97 = scmp.eq.s32.totalorder %s15, 0
    %p98 = por %p96, %p97
    %s99 = ssub.s32 %s16, %s28
    %s100 = ssub.s32 %s17, %s24
    %s101 = sor.u32 %s99, %s100
    %p102 = scmp.eq.s32.totalorder %s101, 0
    %s104 = sadd.s32 %s103, 1
    %s105 = scalar_select %p102, %s103, %s104
    %p108 = pneg %p102
    %p109 = scmp.eq.s32.totalorder %s9, 1
    %p110 = por %p108, %p109
    %p111 = scmp.ne.s32.totalorder %s103, %s106
    %p112 = scmp.eq.s32.totalorder %s9, 0
    %p113 = por %p111, %p112
    %p114 = scmp.ne.s32.totalorder %s103, %s106
    %p115 = scmp.eq.s32.totalorder %s14, 1
    %p116 = por %p114, %p115
    %p117 = scmp.ne.s32.totalorder %s106, %s107
    %p118 = scmp.eq.s32.totalorder %s14, 0
    %p119 = por %p117, %p118
    %p120 = scmp.ne.s32.totalorder %s106, %s107
    %p121 = scmp.eq.s32.totalorder %s15, 1
    %p122 = por %p120, %p121
    %p124 = scmp.ne.s32.totalorder %s107, %s123
    %p125 = scmp.eq.s32.totalorder %s15, 0
    %p126 = por %p124, %p125
    %p127 = scmp.le.s32.totalorder 1, %s9
    %p128 = scmp.lt.s32.totalorder %s9, 3
    %p129 = pnand %p127, %p128
    %p130 = pneg %p129
    // Predicated region
    $region9: #{conv_down_forward.3} parent=5 // pred_check
      _
    $region10: #{conv_down_forward.3} parent=5 // pred_check_branch
      %132 = sbr.rel (%p129) target = $region12
    $region11: #{conv_down_forward.3} parent=5 // pred_region
      %s133 = ssub.s32 %s9, 1
      // Predicated region
      $region13: #{conv_down_forward.3} parent=11 // pred_check
        %p134 = pneg %p70
      $region14: #{conv_down_forward.3} parent=11 // pred_check_branch
        %136 = sbr.rel (%p134) target = $region16
      $region15: #{conv_down_forward.3} parent=11 // pred_region
        _
      $region16: #{conv_down_forward.3} parent=11 // pred_fallthru
        _
      // Predicated region
      $region17: #{conv_down_forward.3} parent=11 // pred_check
        %p137 = pneg %p91
      $region18: #{conv_down_forward.3} parent=11 // pred_check_branch
        %139 = sbr.rel (%p137) target = $region20
      $region19: #{conv_down_forward.3} parent=11 // pred_region
        _
      $region20: #{conv_down_forward.3} parent=11 // pred_fallthru
        _
    $region12: #{conv_down_forward.3} parent=5 // pred_fallthru
      _
    %p140 = scmp.lt.s32.totalorder %s9, 2
    // Predicated region
    $region21: #{conv_down_forward.3} parent=5 // pred_check
      %p141 = pneg %p140
    $region22: #{conv_down_forward.3} parent=5 // pred_check_branch
      %143 = sbr.rel (%p141) target = $region24
    $region23: #{conv_down_forward.3} parent=5 // pred_region
      // Predicated region
      $region25: #{conv_down_forward.3} parent=23 // pred_check
        %p144 = pneg %p43
      $region26: #{conv_down_forward.3} parent=23 // pred_check_branch
        %146 = sbr.rel (%p144) target = $region28
      $region27: #{conv_down_forward.3} parent=23 // pred_region
        %p147 = scmp.lt.s32.totalorder %s16, 1
        %s148 = scalar_select %p147, %s16, 1
        %p149 = scmp.lt.s32.totalorder %s17, 0
        %s150 = scalar_select %p149, %s17, 0
        %s151 = sadd.s32 %s150, %s148
        %s152 = smul.addr %s151, 8
        %s153 = scalar_lea.vmem %s0, %s152
      $region28: #{conv_down_forward.3} parent=23 // pred_fallthru
        _
    $region24: #{conv_down_forward.3} parent=5 // pred_fallthru
      _
    %p154 = scmp.le.s32.totalorder 1, %s9
    %p155 = scmp.lt.s32.totalorder %s9, 3
    %p156 = pnand %p154, %p155
    %p157 = pneg %p156
    // Predicated region
    $region29: #{conv_down_forward.3} parent=5 // pred_check
      _
    $region30: #{conv_down_forward.3} parent=5 // pred_check_branch
      %159 = sbr.rel (%p156) target = $region32
    $region31: #{conv_down_forward.3} parent=5 // pred_region
      %s160 = ssub.s32 %s9, 1
      %p161 = scmp.lt.s32.totalorder %s18, 1
      %s162 = scalar_select %p161, %s18, 1
      %p163 = scmp.lt.s32.totalorder %s19, 0
      %s164 = scalar_select %p163, %s19, 0
      %s165 = sadd.s32 %s164, %s162
      %s166 = smul.addr %s165, 8
      %s167 = scalar_lea.vmem %s0, %s166
      %p168 = pneg %p49
      %p169 = pneg %p46
      %p170 = pneg %p70
      %p171 = pneg %p67
      %p172 = pneg %p91
      %p173 = pneg %p88
      %p174 = pneg %p119
      %p175 = pneg %p116
      %p176 = scmp.lt.s32.totalorder %s18, 1
      %s177 = scalar_select %p176, %s18, 1
      %p178 = scmp.lt.s32.totalorder %s19, 0
      %s179 = scalar_select %p178, %s19, 0
      %s180 = sadd.s32 %s179, %s177
      %s181 = smul.addr %s180, 8
      %s182 = scalar_lea.vmem %s3, %s181
      %p183 = scmp.lt.s32.totalorder %s18, 1
      %s184 = scalar_select %p183, %s18, 1
      %p185 = scmp.lt.s32.totalorder %s19, 0
      %s186 = scalar_select %p185, %s19, 0
      %s187 = sadd.s32 %s186, %s184
      %s188 = smul.addr %s187, 8
      %s189 = scalar_lea.vmem %s0, %s188
      %p190 = scmp.lt.s32.totalorder %s18, 1
      %s191 = scalar_select %p190, %s18, 1
      %p192 = scmp.lt.s32.totalorder %s19, 0
      %s193 = scalar_select %p192, %s19, 0
      %s194 = sadd.s32 %s193, %s191
      %s195 = smul.addr %s194, 8
      %s196 = scalar_lea.vmem %s3, %s195
      %v197 = vld [vmem:[%s189] sm:$0xff]
      %v198 = vld [vmem:[%s1] sm:$0xff]
      %200 = vset.pattern.permute.xlu0 0
      %201 = vperm.xlu0 %200, %v198
      %v202 = vpop.permute.xlu0 %201
      %v204 = vmul.f32 %v197, %v202
      %v205 = vld [vmem:[%s2] sm:$0xff]
      %207 = vset.pattern.permute.xlu0 0
      %208 = vperm.xlu0 %207, %v205
      %v209 = vpop.permute.xlu0 %208
      %v211 = vadd.f32 %v204, %v209
      %v212 = vmax.f32 %v211, 0.0
      %213 = vst [vmem:[%s196] sm:$0xff] %v212
      %p214 = scmp.lt.s32.totalorder %s18, 1
      %s215 = scalar_select %p214, %s18, 1
      %p216 = scmp.lt.s32.totalorder %s19, 0
      %s217 = scalar_select %p216, %s19, 0
      %s218 = sadd.s32 %s217, %s215
      %s219 = smul.addr %s218, 8
      %s220 = scalar_lea.vmem %s3, %s219
      // Predicated region
      $region33: #{conv_down_forward.3} parent=31 // pred_check
        %p221 = pneg %p116
      $region34: #{conv_down_forward.3} parent=31 // pred_check_branch
        %223 = sbr.rel (%p221) target = $region36
      $region35: #{conv_down_forward.3} parent=31 // pred_region
        _
      $region36: #{conv_down_forward.3} parent=31 // pred_fallthru
        _
    $region32: #{conv_down_forward.3} parent=5 // pred_fallthru
      _
    %p224 = scmp.le.s32.totalorder 2, %s9
    // Predicated region
    $region37: #{conv_down_forward.3} parent=5 // pred_check
      %p225 = pneg %p224
    $region38: #{conv_down_forward.3} parent=5 // pred_check_branch
      %227 = sbr.rel (%p225) target = $region40
    $region39: #{conv_down_forward.3} parent=5 // pred_region
      %s228 = ssub.s32 %s9, 2
      // Predicated region
      $region41: #{conv_down_forward.3} parent=39 // pred_check
        %p229 = pneg %p122
      $region42: #{conv_down_forward.3} parent=39 // pred_check_branch
        %231 = sbr.rel (%p229) target = $region44
      $region43: #{conv_down_forward.3} parent=39 // pred_region
        %p232 = scmp.lt.s32.totalorder %s20, 1
        %s233 = scalar_select %p232, %s20, 1
        %p234 = scmp.lt.s32.totalorder %s21, 0
        %s235 = scalar_select %p234, %s21, 0
        %s236 = sadd.s32 %s235, %s233
        %s237 = smul.addr %s236, 8
        %s238 = scalar_lea.vmem %s3, %s237
      $region44: #{conv_down_forward.3} parent=39 // pred_fallthru
        _
    $region40: #{conv_down_forward.3} parent=5 // pred_fallthru
      _
  $region6: #{conv_down_forward.3} parent=0 // loop_footer
    %s13 = sadd.s32 1, %s9
  $region7: #{conv_down_forward.3} parent=0 // loop_footer_branch
    %8 = sbr.rel target = $region3
  $region8: #{conv_down_forward.3} parent=0 // loop_exit
    _

// kernel: conv_down_forward.2
$region0: #{conv_down_forward.2}
  #allocation0 [shape = 'u32[]', space=smem, size = 0x4, offset = 0x4, fixed_abs, tag = 'smem constant byte address 0x4 - core index']
  #allocation1 [shape = 'u32[144,128]{1,0:T(1,128)}', space=vmem, size = 0x12000, scoped, tag = 'internal scratch']
  %s0 = inlined_call_operand.vmem [shape: bf16[2,36,128], index: 0, kind: input, shape index: {}]
  %s1 = inlined_call_operand.vmem [shape: f32[8,36], index: 1, kind: input, shape index: {}]
  %s2 = inlined_call_operand.vmem [shape: f32[2,8,128], index: 2, kind: output, shape index: {0}]
  %s3 = inlined_call_operand.vmem [shape: f32[2,8,1], index: 3, kind: output, shape index: {1}]
  %s4 = inlined_call_operand.vmem [shape: f32[2,8,1], index: 4, kind: output, shape index: {2}]
  %5 = xla_tuple %s2, %s3, %s4
  %s6 = sld [smem:[#allocation0]]
  $region61: #{conv_down_forward.2} parent=0
    _
  %s8 = ssub.s32 1, %s6
  %s9 = scalar_select 0, %s8, %s6
  loop: start=0, step=1, limit=4
  $region2: #{conv_down_forward.2} parent=0 // loop_pre_header
    _
  $region3: #{conv_down_forward.2} parent=0 // loop_header
    %s11 = sphi 0, %s15
    %p12 = scmp.ge.s32.totalorder %s11, 4
    %s18 = sphi 0, %s30
    %s19 = sphi 0, %s26
    %s20 = sphi 0, %s18
    %s21 = sphi 0, %s19
    %s22 = sphi 0, %s20
    %s23 = sphi 0, %s21
    %s35 = sphi 0, %s37
    %s38 = sphi 0, %s35
    %s39 = sphi 0, %s38
    %s55 = sphi 0, %s39
    %s59 = sphi 0, %s59
    %s61 = sphi 0, %s59
    %s62 = sphi 0, %s61
    %s76 = sphi 0, %s62
    %s84 = sphi 0, %s86
    %s87 = sphi 0, %s84
    %s88 = sphi 0, %s87
    %s104 = sphi 0, %s88
    %s110 = sphi 0, %s112
    %s113 = sphi 0, %s110
    %s114 = sphi 0, %s113
    %s130 = sphi 0, %s114
    %s136 = sphi 0, %s138
    %s139 = sphi 0, %s136
    %s140 = sphi 0, %s139
    %s156 = sphi 0, %s140
  $region4: #{conv_down_forward.2} parent=0 // loop_header_branch
    %14 = sbr.rel (%p12) target = $region8
  $region5: #{conv_down_forward.2} parent=0 // loop_body
    %s16 = ssub.s32 %s11, 1
    %s17 = ssub.s32 %s11, 2
    %s24 = sadd.s32 1, %s19
    %p25 = scmp.ge.s32.totalorder %s24, 1
    %s26 = scalar_select %p25, 0, %s24
    %s27 = sadd.s32 1, %s18
    %s28 = scalar_select %p25, %s27, %s18
    %p29 = scmp.ge.s32.totalorder %s28, 2
    %s30 = scalar_select %p29, 0, %s28
    %s31 = ssub.s32 %s18, %s30
    %s32 = ssub.s32 %s19, %s26
    %s33 = sor.u32 %s31, %s32
    %p34 = scmp.eq.s32.totalorder %s33, 0
    %s36 = sadd.s32 %s35, 1
    %s37 = scalar_select %p34, %s35, %s36
    %p40 = pneg %p34
    %p41 = scmp.eq.s32.totalorder %s11, 1
    %p42 = por %p40, %p41
    %p43 = scmp.ne.s32.totalorder %s35, %s38
    %p44 = scmp.eq.s32.totalorder %s11, 0
    %p45 = por %p43, %p44
    %p46 = scmp.ne.s32.totalorder %s35, %s38
    %p47 = scmp.eq.s32.totalorder %s16, 1
    %p48 = por %p46, %p47
    %p49 = scmp.ne.s32.totalorder %s38, %s39
    %p50 = scmp.eq.s32.totalorder %s16, 0
    %p51 = por %p49, %p50
    %p52 = scmp.ne.s32.totalorder %s38, %s39
    %p53 = scmp.eq.s32.totalorder %s17, 1
    %p54 = por %p52, %p53
    %p56 = scmp.ne.s32.totalorder %s39, %s55
    %p57 = scmp.eq.s32.totalorder %s17, 0
    %p58 = por %p56, %p57
    %s60 = sadd.s32 %s59, 1
    %p63 = scmp.eq.s32.totalorder %s11, 1
    %p64 = scmp.ne.s32.totalorder %s59, %s61
    %p65 = scmp.eq.s32.totalorder %s11, 0
    %p66 = por %p64, %p65
    %p67 = scmp.ne.s32.totalorder %s59, %s61
    %p68 = scmp.eq.s32.totalorder %s16, 1
    %p69 = por %p67, %p68
    %p70 = scmp.ne.s32.totalorder %s61, %s62
    %p71 = scmp.eq.s32.totalorder %s16, 0
    %p72 = por %p70, %p71
    %p73 = scmp.ne.s32.totalorder %s61, %s62
    %p74 = scmp.eq.s32.totalorder %s17, 1
    %p75 = por %p73, %p74
    %p77 = scmp.ne.s32.totalorder %s62, %s76
    %p78 = scmp.eq.s32.totalorder %s17, 0
    %p79 = por %p77, %p78
    %s80 = ssub.s32 %s18, %s30
    %s81 = ssub.s32 %s19, %s26
    %s82 = sor.u32 %s80, %s81
    %p83 = scmp.eq.s32.totalorder %s82, 0
    %s85 = sadd.s32 %s84, 1
    %s86 = scalar_select %p83, %s84, %s85
    %p89 = pneg %p83
    %p90 = scmp.eq.s32.totalorder %s11, 1
    %p91 = por %p89, %p90
    %p92 = scmp.ne.s32.totalorder %s84, %s87
    %p93 = scmp.eq.s32.totalorder %s11, 0
    %p94 = por %p92, %p93
    %p95 = scmp.ne.s32.totalorder %s84, %s87
    %p96 = scmp.eq.s32.totalorder %s16, 1
    %p97 = por %p95, %p96
    %p98 = scmp.ne.s32.totalorder %s87, %s88
    %p99 = scmp.eq.s32.totalorder %s16, 0
    %p100 = por %p98, %p99
    %p101 = scmp.ne.s32.totalorder %s87, %s88
    %p102 = scmp.eq.s32.totalorder %s17, 1
    %p103 = por %p101, %p102
    %p105 = scmp.ne.s32.totalorder %s88, %s104
    %p106 = scmp.eq.s32.totalorder %s17, 0
    %p107 = por %p105, %p106
    %s108 = ssub.s32 %s18, %s30
    %p109 = scmp.eq.s32.totalorder %s108, 0
    %s111 = sadd.s32 %s110, 1
    %s112 = scalar_select %p109, %s110, %s111
    %p115 = pneg %p109
    %p116 = scmp.eq.s32.totalorder %s11, 1
    %p117 = por %p115, %p116
    %p118 = scmp.ne.s32.totalorder %s110, %s113
    %p119 = scmp.eq.s32.totalorder %s11, 0
    %p120 = por %p118, %p119
    %p121 = scmp.ne.s32.totalorder %s110, %s113
    %p122 = scmp.eq.s32.totalorder %s16, 1
    %p123 = por %p121, %p122
    %p124 = scmp.ne.s32.totalorder %s113, %s114
    %p125 = scmp.eq.s32.totalorder %s16, 0
    %p126 = por %p124, %p125
    %p127 = scmp.ne.s32.totalorder %s113, %s114
    %p128 = scmp.eq.s32.totalorder %s17, 1
    %p129 = por %p127, %p128
    %p131 = scmp.ne.s32.totalorder %s114, %s130
    %p132 = scmp.eq.s32.totalorder %s17, 0
    %p133 = por %p131, %p132
    %s134 = ssub.s32 %s18, %s30
    %p135 = scmp.eq.s32.totalorder %s134, 0
    %s137 = sadd.s32 %s136, 1
    %s138 = scalar_select %p135, %s136, %s137
    %p141 = pneg %p135
    %p142 = scmp.eq.s32.totalorder %s11, 1
    %p143 = por %p141, %p142
    %p144 = scmp.ne.s32.totalorder %s136, %s139
    %p145 = scmp.eq.s32.totalorder %s11, 0
    %p146 = por %p144, %p145
    %p147 = scmp.ne.s32.totalorder %s136, %s139
    %p148 = scmp.eq.s32.totalorder %s16, 1
    %p149 = por %p147, %p148
    %p150 = scmp.ne.s32.totalorder %s139, %s140
    %p151 = scmp.eq.s32.totalorder %s16, 0
    %p152 = por %p150, %p151
    %p153 = scmp.ne.s32.totalorder %s139, %s140
    %p154 = scmp.eq.s32.totalorder %s17, 1
    %p155 = por %p153, %p154
    %p157 = scmp.ne.s32.totalorder %s140, %s156
    %p158 = scmp.eq.s32.totalorder %s17, 0
    %p159 = por %p157, %p158
    %p160 = scmp.le.s32.totalorder 1, %s11
    %p161 = scmp.lt.s32.totalorder %s11, 3
    %p162 = pnand %p160, %p161
    %p163 = pneg %p162
    // Predicated region
    $region9: #{conv_down_forward.2} parent=5 // pred_check
      _
    $region10: #{conv_down_forward.2} parent=5 // pred_check_branch
      %165 = sbr.rel (%p162) target = $region12
    $region11: #{conv_down_forward.2} parent=5 // pred_region
      %s166 = ssub.s32 %s11, 1
      // Predicated region
      $region13: #{conv_down_forward.2} parent=11 // pred_check
        %p167 = pneg %p72
      $region14: #{conv_down_forward.2} parent=11 // pred_check_branch
        %169 = sbr.rel (%p167) target = $region16
      $region15: #{conv_down_forward.2} parent=11 // pred_region
        _
      $region16: #{conv_down_forward.2} parent=11 // pred_fallthru
        _
    $region12: #{conv_down_forward.2} parent=5 // pred_fallthru
      _
    %p170 = scmp.lt.s32.totalorder %s11, 2
    // Predicated region
    $region17: #{conv_down_forward.2} parent=5 // pred_check
      %p171 = pneg %p170
    $region18: #{conv_down_forward.2} parent=5 // pred_check_branch
      %173 = sbr.rel (%p171) target = $region20
    $region19: #{conv_down_forward.2} parent=5 // pred_region
      // Predicated region
      $region21: #{conv_down_forward.2} parent=19 // pred_check
        %p174 = pneg %p45
      $region22: #{conv_down_forward.2} parent=19 // pred_check_branch
        %176 = sbr.rel (%p174) target = $region24
      $region23: #{conv_down_forward.2} parent=19 // pred_region
        %p177 = scmp.lt.s32.totalorder %s18, 1
        %s178 = scalar_select %p177, %s18, 1
        %p179 = scmp.lt.s32.totalorder %s19, 0
        %s180 = scalar_select %p179, %s19, 0
        %s181 = smul.addr %s178, 5
        %s182 = sadd.s32 %s180, %s181
        %s183 = smul.addr %s182, 4
        %s184 = scalar_lea.vmem %s0, %s183
      $region24: #{conv_down_forward.2} parent=19 // pred_fallthru
        _
    $region20: #{conv_down_forward.2} parent=5 // pred_fallthru
      _
    %p185 = scmp.le.s32.totalorder 1, %s11
    %p186 = scmp.lt.s32.totalorder %s11, 3
    %p187 = pnand %p185, %p186
    %p188 = pneg %p187
    // Predicated region
    $region25: #{conv_down_forward.2} parent=5 // pred_check
      _
    $region26: #{conv_down_forward.2} parent=5 // pred_check_branch
      %190 = sbr.rel (%p187) target = $region28
    $region27: #{conv_down_forward.2} parent=5 // pred_region
      %s191 = ssub.s32 %s11, 1
      %p192 = scmp.lt.s32.totalorder %s20, 1
      %s193 = scalar_select %p192, %s20, 1
      %p194 = scmp.lt.s32.totalorder %s21, 0
      %s195 = scalar_select %p194, %s21, 0
      %s196 = smul.addr %s193, 5
      %s197 = sadd.s32 %s195, %s196
      %s198 = smul.addr %s197, 4
      %s199 = scalar_lea.vmem %s0, %s198
      %p200 = pneg %p51
      %p201 = pneg %p48
      %p202 = pneg %p72
      %p203 = pneg %p69
      %p204 = pneg %p100
      %p205 = pneg %p97
      %p206 = scmp.lt.s32.totalorder %s20, 1
      %s207 = scalar_select %p206, %s20, 1
      %p208 = scmp.lt.s32.totalorder %s21, 0
      %s209 = scalar_select %p208, %s21, 0
      %s210 = sadd.s32 %s209, %s207
      %s211 = smul.addr %s210, 8
      %s212 = scalar_lea.vmem %s2, %s211
      %p213 = pneg %p126
      %p214 = pneg %p123
      %p215 = scmp.lt.s32.totalorder %s20, 1
      %s216 = scalar_select %p215, %s20, 1
      %s217 = smul.addr %s216, 8
      %s218 = scalar_lea.vmem %s3, %s217
      %p219 = pneg %p152
      %p220 = pneg %p149
      %p221 = scmp.lt.s32.totalorder %s20, 1
      %s222 = scalar_select %p221, %s20, 1
      %s223 = smul.addr %s222, 8
      %s224 = scalar_lea.vmem %s4, %s223
      %p225 = scmp.lt.s32.totalorder %s20, 1
      %s226 = scalar_select %p225, %s20, 1
      %p227 = scmp.lt.s32.totalorder %s21, 0
      %s228 = scalar_select %p227, %s21, 0
      %s229 = smul.addr %s226, 5
      %s230 = sadd.s32 %s228, %s229
      %s231 = smul.addr %s230, 4
      %s232 = scalar_lea.vmem %s0, %s231
      %p233 = scmp.lt.s32.totalorder %s20, 1
      %s234 = scalar_select %p233, %s20, 1
      %p235 = scmp.lt.s32.totalorder %s21, 0
      %s236 = scalar_select %p235, %s21, 0
      %s237 = sadd.s32 %s236, %s234
      %s238 = smul.addr %s237, 8
      %s239 = scalar_lea.vmem %s2, %s238
      %p240 = scmp.lt.s32.totalorder %s20, 1
      %s241 = scalar_select %p240, %s20, 1
      %s242 = smul.addr %s241, 8
      %s243 = scalar_lea.vmem %s3, %s242
      %p244 = scmp.lt.s32.totalorder %s20, 1
      %s245 = scalar_select %p244, %s20, 1
      %s246 = smul.addr %s245, 8
      %s247 = scalar_lea.vmem %s4, %s246
      %p248 = scmp.eq.s32.totalorder %s21, 0
      // Predicated region
      $region29: #{conv_down_forward.2} parent=27 // pred_check
        %p249 = pneg %p248
      $region30: #{conv_down_forward.2} parent=27 // pred_check_branch
        %251 = sbr.rel (%p249) target = $region32
      $region31: #{conv_down_forward.2} parent=27 // pred_region
        %vm252 = vcmask 7168
        %253 = vst.msk [vmem:[%s243] sm:$0xff] %vm252, 0.0
        %254 = vst.msk [vmem:[%s247] sm:$0xff] %vm252, 0.0
      $region32: #{conv_down_forward.2} parent=27 // pred_fallthru
        _
      %v255 = vld [vmem:[%s232] sm:$0xf]
      %v256 = vld [vmem:[%s232 + $0x4] sm:$0xf]
      %v257 = vld [vmem:[%s232 + $0x8] sm:$0xf]
      %v258 = vld [vmem:[%s232 + $0xc] sm:$0xf]
      %v259 = vld [vmem:[%s232 + $0x10] sm:$0x3]
      %v260 = vunpack.c.l.bf16 %v255
      %v261 = vunpack.c.l.bf16 %v256
      %v262 = vunpack.c.l.bf16 %v257
      %v263 = vunpack.c.l.bf16 %v258
      %v264 = vunpack.c.l.bf16 %v259
      %v265 = vld [vmem:[%s1] sm:$0xff]
      %vm266 = vcmask 293888
      %v268 = vsel %vm266, %v265, 0
      %vm270 = vcmask 1043456
      %v272 = vsel %vm270, %v264, 0
      %274 = vmatprep.subr.mxu0 0.0
      %275 = vmatpush1.msra.mxu0 %v260
      %276 = vmatprep.subr.mxu0 0.0
      %277 = vmatpush1.msra.mxu0 %v261
      %278 = vmatprep.subr.mxu0 0.0
      %279 = vmatpush1.msra.mxu0 %v262
      %280 = vmatprep.subr.mxu0 0.0
      %281 = vmatpush1.msra.mxu0 %v263
      %282 = vmatprep.subr.mxu0 0.0
      %283 = vmatpush1.msra.mxu0 %v272
      %284 = vmatprep.subr.mxu0 0.0
      %285 = vmatpush1.msra.mxu0 0.0
      %286 = vmatprep.subr.mxu0 0.0
      %287 = vmatpush1.msra.mxu0 0.0
      %288 = vmatprep.subr.mxu0 0.0
      %289 = vmatpush1.msra.mxu0 0.0
      %290 = vmatprep.subr.mxu0 0.0
      %291 = vmatpush1.msra.mxu0 0.0
      %292 = vmatprep.subr.mxu0 0.0
      %293 = vmatpush1.msra.mxu0 0.0
      %294 = vmatprep.subr.mxu0 0.0
      %295 = vmatpush1.msra.mxu0 0.0
      %296 = vmatprep.subr.mxu0 0.0
      %297 = vmatpush1.msra.mxu0 0.0
      %298 = vmatprep.subr.mxu0 0.0
      %299 = vmatpush1.msra.mxu0 0.0
      %300 = vmatprep.subr.mxu0 0.0
      %301 = vmatpush1.msra.mxu0 0.0
      %302 = vmatprep.subr.mxu0 0.0
      %303 = vmatpush1.msra.mxu0 0.0
      %304 = vmatprep.subr.mxu0 0.0
      %305 = vmatpush1.msra.mxu0 0.0
      %306 = vmatprep.subr.mxu0 0.0
      %307 = vmatpush1.msra.mxu0 0.0
      %308 = vmatprep.subr.mxu0 0.0
      %309 = vmatpush1.msra.mxu0 0.0
      %310 = vmatprep.subr.mxu0 0.0
      %311 = vmatpush1.msra.mxu0 0.0
      %312 = vmatprep.subr.mxu0 0.0
      %313 = vmatpush1.msra.mxu0 0.0
      %314 = vmatprep.subr.mxu0 0.0
      %315 = vmatpush1.msra.mxu0 0.0
      %316 = vmatprep.subr.mxu0 0.0
      %317 = vmatpush1.msra.mxu0 0.0
      %318 = vmatprep.subr.mxu0 0.0
      %319 = vmatpush1.msra.mxu0 0.0
      %320 = vmatprep.subr.mxu0 0.0
      %321 = vmatpush1.msra.mxu0 0.0
      %322 = vmatprep.subr.mxu0 0.0
      %323 = vmatpush1.msra.mxu0 0.0
      %324 = vmatprep.subr.mxu0 0.0
      %325 = vmatpush1.msra.mxu0 0.0
      %326 = vmatprep.subr.mxu0 0.0
      %327 = vmatpush1.msra.mxu0 0.0
      %328 = vmatprep.subr.mxu0 0.0
      %329 = vmatpush1.msra.mxu0 0.0
      %330 = vmatprep.subr.mxu0 0.0
      %331 = vmatpush1.msra.mxu0 0.0
      %332 = vmatprep.subr.mxu0 0.0
      %333 = vmatpush1.msra.mxu0 0.0
      %334 = vmatprep.subr.mxu0 0.0
      %335 = vmatpush1.msra.mxu0 0.0
      %336 = vmatprep.subr.mxu0 0.0
      %337 = vmatpush1.msra.mxu0 0.0
      %338 = vmatprep.mubr.f32.mxu0 0.0
      %339 = vmatmul.mubr.f32.gmra.mrb[0].mxu0 %v268
      %v340 = vpop.f32.mrb[0].mxu0
      %v341 = vadd.f32 0.0, %v340
      %v342 = vpop.f32.mrb[0].mxu0
      %343 = vdwg.mxu0
      %344 = vst [vmem:[%s239] sm:$0xff] %v341
      %v345 = vld [vmem:[%s243] sm:$0xff]
      %346 = vadd.xlane.f32.xlu0 %v341
      %v347 = vpop.xlane.xlu0 %346
      %v348 = vadd.f32 %v345, %v347
      %vm349 = vcmask 7168
      %350 = vst.msk [vmem:[%s243] sm:$0xff] %vm349, %v348
      %v351 = vld [vmem:[%s247] sm:$0xff]
      %v352 = vmul.f32 %v341, %v341
      %353 = vadd.xlane.f32.xlu0 %v352
      %v354 = vpop.xlane.xlu0 %353
      %v355 = vadd.f32 %v351, %v354
      %356 = vst.msk [vmem:[%s247] sm:$0xff] %vm349, %v355
      %p357 = scmp.lt.s32.totalorder %s20, 1
      %s358 = scalar_select %p357, %s20, 1
      %p359 = scmp.lt.s32.totalorder %s21, 0
      %s360 = scalar_select %p359, %s21, 0
      %s361 = sadd.s32 %s360, %s358
      %s362 = smul.addr %s361, 8
      %s363 = scalar_lea.vmem %s2, %s362
      %p364 = scmp.lt.s32.totalorder %s20, 1
      %s365 = scalar_select %p364, %s20, 1
      %s366 = smul.addr %s365, 8
      %s367 = scalar_lea.vmem %s3, %s366
      %p368 = scmp.lt.s32.totalorder %s20, 1
      %s369 = scalar_select %p368, %s20, 1
      %s370 = smul.addr %s369, 8
      %s371 = scalar_lea.vmem %s4, %s370
      // Predicated region
      $region33: #{conv_down_forward.2} parent=27 // pred_check
        %p372 = pneg %p97
      $region34: #{conv_down_forward.2} parent=27 // pred_check_branch
        %374 = sbr.rel (%p372) target = $region36
      $region35: #{conv_down_forward.2} parent=27 // pred_region
        _
      $region36: #{conv_down_forward.2} parent=27 // pred_fallthru
        _
      // Predicated region
      $region37: #{conv_down_forward.2} parent=27 // pred_check
        %p375 = pneg %p123
      $region38: #{conv_down_forward.2} parent=27 // pred_check_branch
        %377 = sbr.rel (%p375) target = $region40
      $region39: #{conv_down_forward.2} parent=27 // pred_region
        _
      $region40: #{conv_down_forward.2} parent=27 // pred_fallthru
        _
      // Predicated region
      $region41: #{conv_down_forward.2} parent=27 // pred_check
        %p378 = pneg %p149
      $region42: #{conv_down_forward.2} parent=27 // pred_check_branch
        %380 = sbr.rel (%p378) target = $region44
      $region43: #{conv_down_forward.2} parent=27 // pred_region
        _
      $region44: #{conv_down_forward.2} parent=27 // pred_fallthru
        _
    $region28: #{conv_down_forward.2} parent=5 // pred_fallthru
      _
    %p381 = scmp.le.s32.totalorder 2, %s11
    // Predicated region
    $region45: #{conv_down_forward.2} parent=5 // pred_check
      %p382 = pneg %p381
    $region46: #{conv_down_forward.2} parent=5 // pred_check_branch
      %384 = sbr.rel (%p382) target = $region48
    $region47: #{conv_down_forward.2} parent=5 // pred_region
      %s385 = ssub.s32 %s11, 2
      // Predicated region
      $region49: #{conv_down_forward.2} parent=47 // pred_check
        %p386 = pneg %p103
      $region50: #{conv_down_forward.2} parent=47 // pred_check_branch
        %388 = sbr.rel (%p386) target = $region52
      $region51: #{conv_down_forward.2} parent=47 // pred_region
        %p389 = scmp.lt.s32.totalorder %s22, 1
        %s390 = scalar_select %p389, %s22, 1
        %p391 = scmp.lt.s32.totalorder %s23, 0
        %s392 = scalar_select %p391, %s23, 0
        %s393 = sadd.s32 %s392, %s390
        %s394 = smul.addr %s393, 8
        %s395 = scalar_lea.vmem %s2, %s394
      $region52: #{conv_down_forward.2} parent=47 // pred_fallthru
        _
      // Predicated region
      $region53: #{conv_down_forward.2} parent=47 // pred_check
        %p396 = pneg %p129
      $region54: #{conv_down_forward.2} parent=47 // pred_check_branch
        %398 = sbr.rel (%p396) target = $region56
      $region55: #{conv_down_forward.2} parent=47 // pred_region
        %p399 = scmp.lt.s32.totalorder %s22, 1
        %s400 = scalar_select %p399, %s22, 1
        %s401 = smul.addr %s400, 8
        %s402 = scalar_lea.vmem %s3, %s401
      $region56: #{conv_down_forward.2} parent=47 // pred_fallthru
        _
      // Predicated region
      $region57: #{conv_down_forward.2} parent=47 // pred_check
        %p403 = pneg %p155
      $region58: #{conv_down_forward.2} parent=47 // pred_check_branch
        %405 = sbr.rel (%p403) target = $region60
      $region59: #{conv_down_forward.2} parent=47 // pred_region
        %p406 = scmp.lt.s32.totalorder %s22, 1
        %s407 = scalar_select %p406, %s22, 1
        %s408 = smul.addr %s407, 8
        %s409 = scalar_lea.vmem %s4, %s408
      $region60: #{conv_down_forward.2} parent=47 // pred_fallthru
        _
    $region48: #{conv_down_forward.2} parent=5 // pred_fallthru
      _
  $region6: #{conv_down_forward.2} parent=0 // loop_footer
    %s15 = sadd.s32 1, %s11
  $region7: #{conv_down_forward.2} parent=0 // loop_footer_branch
    %10 = sbr.rel target = $region3
  $region8: #{conv_down_forward.2} parent=0 // loop_exit
    _

</llo_original>
